<compile_context>
chip_gen: v5e
topology: v5e:2x2
jax: 0.10.0
libtpu: 0.0.40
codegen_flags: <defaults>
</compile_context>

<pallas_src>
from functools import partial

import jax
import jax.numpy as jnp
import numpy as np
from jax import lax
from jax.experimental import pallas as pl
from jax.experimental.pallas import tpu as pltpu


# ---------------------------------------------------------------------------
# Kernel 1: HBM-resident table, double-buffered DMA row gather.
# ---------------------------------------------------------------------------
def _seg_embed_hbm_kernel(ids_ref, emb_hbm, pe_ref, out_ref, gather_buf, sems):
    """One grid step = TS tokens of one batch row.

    ids_ref:    (B*S_pad,) int32 -- scalar prefetch (SMEM), addressing only
    emb_hbm:    (V, D)           -- full embedding table, left in HBM (pl.ANY)
    pe_ref:     (TS, D) f32      -- positional-encoding rows for this seq tile
    out_ref:    (1, TS, D) f32
    gather_buf: (2*TS, D)        -- VMEM scratch: two slots of TS gathered rows
    sems:       (2,) DMA sems    -- one aggregate semaphore per slot
    """
    s = pl.program_id(0)
    b = pl.program_id(1)
    ns = pl.num_programs(0)
    nb = pl.num_programs(1)
    ts = out_ref.shape[1]
    vocab = emb_hbm.shape[0]
    s_pad = ns * ts                           # padded sequence length

    step = s * nb + b                         # linear step (b is the fastest axis)
    num_steps = ns * nb
    slot = lax.rem(step, 2)
    next_slot = 1 - slot

    def issue_tile(tile_s, tile_b, which_slot):
        """Start TS row DMAs for tile (tile_s, tile_b) into slot `which_slot`."""
        base = tile_b * s_pad + tile_s * ts
        row0 = which_slot * ts

        def body(j, carry):
            tok = ids_ref[base + j]
            tok = jnp.minimum(jnp.maximum(tok, 0), vocab - 1)   # clamp OOB ids
            pltpu.make_async_copy(
                emb_hbm.at[pl.ds(tok, 1), :],
                gather_buf.at[pl.ds(row0 + j, 1), :],
                sems.at[which_slot],
            ).start()
            return carry

        # Fully unrolled: lets the scheduler pipeline SMEM id loads, clamps and
        # descriptor pushes instead of serializing them one per iteration.
        lax.fori_loop(0, ts, body, 0, unroll=True)

    # Prime the pipeline: the very first step gathers its own tile.
    @pl.when(step == 0)
    def _prime():
        issue_tile(s, b, slot)

    # Double-buffer: start the NEXT step's row gathers (ids already in SMEM)
    # BEFORE waiting on the current slot, so the HBM gather latency of step
    # i+1 is hidden behind step i's wait + add.  (Scalar reads happen before
    # the wait, which also avoids breaking SMEM sst->sld forwarding.)
    @pl.when(step + 1 < num_steps)
    def _prefetch_next():
        nxt = step + 1
        issue_tile(nxt // nb, lax.rem(nxt, nb), next_slot)

    # ONE aggregate wait for all TS row copies of this step's slot.  The wait
    # descriptor is used only for its byte count (TS*D*itemsize), which equals
    # the sum of the TS row copies that signalled sems[slot].
    cur_off = pl.multiple_of(slot * ts, ts)
    cur_view = gather_buf.at[pl.ds(cur_off, ts), :]
    pltpu.make_async_copy(cur_view, cur_view, sems.at[slot]).wait()

    # Fused positional-encoding add; lane-dense (D-last) full-tile store.
    out_ref[0] = gather_buf[pl.ds(cur_off, ts), :] + pe_ref[...]


# ---------------------------------------------------------------------------
# Kernel 2: small-table fast path -- table resident in VMEM, local row loads.
# ---------------------------------------------------------------------------
def _seg_embed_vmem_kernel(ids_ref, emb_ref, pe_ref, out_ref, gather_buf):
    s = pl.program_id(0)
    b = pl.program_id(1)
    ns = pl.num_programs(0)
    ts = out_ref.shape[1]
    vocab = emb_ref.shape[0]
    s_pad = ns * ts
    base = b * s_pad + s * ts

    def body(j, carry):
        tok = ids_ref[base + j]
        tok = jnp.minimum(jnp.maximum(tok, 0), vocab - 1)        # clamp OOB ids
        gather_buf[pl.ds(j, 1), :] = emb_ref[pl.ds(tok, 1), :]   # cheap VMEM row load
        return carry

    lax.fori_loop(0, ts, body, 0, unroll=True)
    out_ref[0] = gather_buf[...] + pe_ref[...]


# ---------------------------------------------------------------------------
# Wrapper
# ---------------------------------------------------------------------------
def _round_up(x: int, m: int) -> int:
    return (x + m - 1) // m * m


def _choose_seq_tile(seq_len: int, d_model: int) -> int:
    """Tokens per grid step: big (amortizes ~0.35us/step), multiple of 8, and
    small enough that ~8 tile-sized buffers fit inside v7x's 64 MiB/TC VMEM."""
    ts = 256
    while ts > 8 and 8 * ts * d_model * 4 > 40 * 1024 * 1024:
        ts //= 2
    return min(ts, max(8, _round_up(seq_len, 8)))


@partial(jax.jit, static_argnames=("force_hbm_gather",))
def seg_embedding_forward(ids, emb_weight, pe_table, *, force_hbm_gather=False):
    """Forward pass of SegEmbedding: embedding(ids) + positional_encoding (eval)."""
    B, S = ids.shape
    V, D = emb_weight.shape
    TS = _choose_seq_tile(S, D)
    S_pad = _round_up(S, TS)
    n_s = S_pad // TS

    # Positional-encoding rows for this sequence (zero-pad up to the tile grid;
    # the padded rows are sliced off after the kernel).
    pe = pe_table[:S].astype(jnp.float32)
    pe = jnp.pad(pe, ((0, S_pad - pe.shape[0]), (0, 0)))

    # Flat 1-D ids for scalar prefetch: keeps SMEM footprint O(B*S_pad) words
    # instead of the padded 2-D (ceil(B/8)*8, ceil(S/128)*128) layout.
    ids_pad = jnp.pad(ids.astype(jnp.int32), ((0, 0), (0, S_pad - S)))
    ids_flat = ids_pad.reshape(B * S_pad)

    itemsize = emb_weight.dtype.itemsize
    use_vmem_table = (V * D * itemsize <= 4 * 1024 * 1024) and not force_hbm_gather

    cost = pl.CostEstimate(
        flops=B * S_pad * D,                              # PE add
        transcendentals=0,
        bytes_accessed=(B * S_pad * D * itemsize          # row gather reads
                        + B * S_pad * D * 4               # output writes
                        + S_pad * D * 4                   # PE read (once: s is the outer axis)
                        + B * S_pad * 4),                 # ids
    )

    if use_vmem_table:
        grid_spec = pltpu.PrefetchScalarGridSpec(
            num_scalar_prefetch=1,                                     # ids -> SMEM
            grid=(n_s, B),                                             # s outer, b inner
            in_specs=[
                pl.BlockSpec((V, D), lambda s, b, ids_sm: (0, 0)),     # whole table in VMEM
                pl.BlockSpec((TS, D), lambda s, b, ids_sm: (s, 0)),    # PE tile, reused across b
            ],
            out_specs=pl.BlockSpec((1, TS, D), lambda s, b, ids_sm: (b, s, 0)),
            scratch_shapes=[pltpu.VMEM((TS, D), emb_weight.dtype)],
        )
        kernel = _seg_embed_vmem_kernel
        dims = ("parallel", "parallel")
    else:
        grid_spec = pltpu.PrefetchScalarGridSpec(
            num_scalar_prefetch=1,
            grid=(n_s, B),
            in_specs=[
                pl.BlockSpec(memory_space=pl.ANY),                     # table stays in HBM
                pl.BlockSpec((TS, D), lambda s, b, ids_sm: (s, 0)),    # PE tile, reused across b
            ],
            out_specs=pl.BlockSpec((1, TS, D), lambda s, b, ids_sm: (b, s, 0)),
            scratch_shapes=[
                pltpu.VMEM((2 * TS, D), emb_weight.dtype),             # double-buffered gather
                pltpu.SemaphoreType.DMA((2,)),                         # one aggregate sem per slot
            ],
        )
        kernel = _seg_embed_hbm_kernel
        # Cross-step double buffering relies on strictly sequential iteration
        # order (priming at step 0), so this grid is not megacore-split.
        dims = ("arbitrary", "arbitrary")

    out = pl.pallas_call(
        kernel,
        grid_spec=grid_spec,
        out_shape=jax.ShapeDtypeStruct((B, S_pad, D), jnp.float32),
        compiler_params=pltpu.CompilerParams(
            dimension_semantics=dims,
            vmem_limit_bytes=48 * 1024 * 1024,   # TS capped so this fits v7x's 64 MiB/TC
        ),
        cost_estimate=cost,
    )(ids_flat, emb_weight, pe)

    return out[:, :S, :]


def make_sinusoidal_pe(max_len, d_model):
    """Standard transformer positional encoding table (max_len, d_model)."""
    pos = np.arange(max_len, dtype=np.float32)[:, None]               # (L, 1)
    i2 = np.arange(0, d_model, 2, dtype=np.float32)[None, :]          # (1, D/2)
    div = np.exp(-np.log(10000.0) * i2 / float(d_model))
    pe = np.zeros((max_len, d_model), dtype=np.float32)
    pe[:, 0::2] = np.sin(pos * div)
    pe[:, 1::2] = np.cos(pos * div)
    return jnp.asarray(pe)


if __name__ == "__main__":
    # Small shapes consistent with the module's forward.
    B, S = 2, 8            # batch, sequence length
    d_model = 32
    vocab_size = 64
    max_len = 16
    pad_id = 0

    key = jax.random.PRNGKey(0)
    k_emb, k_ids = jax.random.split(key)

    # Deterministic parameter init (nn.Embedding with padding_idx=pad_id:
    # the padding row is zero).
    emb_weight = 0.02 * jax.random.normal(k_emb, (vocab_size, d_model), jnp.float32)
    emb_weight = emb_weight.at[pad_id].set(0.0)

    pe_table = make_sinusoidal_pe(max_len, d_model)

    ids = jax.random.randint(k_ids, (B, S), 0, vocab_size, dtype=jnp.int32)
    ids = ids.at[0, 0].set(pad_id)  # exercise the padding row

    # Pure-JAX/numpy reference.
    ref = np.asarray(emb_weight)[np.asarray(ids)] + np.asarray(pe_table)[:S][None, :, :]

    # Path 1: small table -> VMEM-resident fast path (what these shapes hit).
    out_vmem = jax.block_until_ready(seg_embedding_forward(ids, emb_weight, pe_table))
    assert out_vmem.shape == (B, S, d_model) and out_vmem.dtype == jnp.float32
    np.testing.assert_allclose(np.asarray(out_vmem), ref, rtol=1e-6, atol=1e-6)

    # Path 2: force the HBM-table double-buffered DMA-gather path and check it too.
    out_hbm = jax.block_until_ready(
        seg_embedding_forward(ids, emb_weight, pe_table, force_hbm_gather=True))
    assert out_hbm.shape == (B, S, d_model) and out_hbm.dtype == jnp.float32
    np.testing.assert_allclose(np.asarray(out_hbm), ref, rtol=1e-6, atol=1e-6)

    print("KERNEL_OK")
</pallas_src>

<mosaic_0001>
module attributes {stable_mosaic.version = 11 : i64} {
  func.func @_seg_embed_vmem_kernel(%arg0: i32, %arg1: i32, %arg2: memref<16xi32, #tpu.memory_space<smem>>, %arg3: memref<64x32xf32, #tpu.memory_space<vmem>>, %arg4: memref<8x32xf32, #tpu.memory_space<vmem>>, %arg5: memref<1x8x32xf32, #tpu.memory_space<vmem>>, %arg6: memref<8x32xf32, #tpu.memory_space<vmem>>) attributes {dimension_semantics = [#tpu.dimension_semantics<parallel>, #tpu.dimension_semantics<parallel>], iteration_bounds = array<i64: 1, 2>, scalar_prefetch = 1 : i64, scratch_operands = 1 : i64, tpu.core_type = #tpu.core_type<tc>, window_params = [{pipeline_mode = #tpu.pipeline_mode<synchronous>, transform_indices = @transform_0, window_bounds = array<i64: 64, 32>}, {transform_indices = @transform_1, window_bounds = array<i64: 8, 32>}, {transform_indices = @transform_2, window_bounds = array<i64: 1, 8, 32>}]} {
    %c8_i32 = arith.constant 8 : i32
    %0 = arith.muli %arg1, %c8_i32 : i32
    %c8_i32_0 = arith.constant 8 : i32
    %1 = arith.muli %arg0, %c8_i32_0 : i32
    %2 = arith.addi %0, %1 : i32
    %c0_i32 = arith.constant 0 : i32
    %3 = arith.addi %2, %c0_i32 : i32
    %4 = arith.index_cast %3 : i32 to index
    %5 = memref.load %arg2[%4] : memref<16xi32, #tpu.memory_space<smem>>
    %c0_i32_1 = arith.constant 0 : i32
    %6 = arith.maxsi %5, %c0_i32_1 : i32
    %c63_i32 = arith.constant 63 : i32
    %7 = arith.minsi %6, %c63_i32 : i32
    %8 = arith.index_cast %7 : i32 to index
    %c0 = arith.constant 0 : index
    %9 = vector.load %arg3[%8, %c0] : memref<64x32xf32, #tpu.memory_space<vmem>>, vector<1x32xf32>
    %10 = arith.index_cast %c0_i32 : i32 to index
    %c0_2 = arith.constant 0 : index
    %11 = vector.load %arg6[%10, %c0_2] : memref<8x32xf32, #tpu.memory_space<vmem>>, vector<1x32xf32>
    tpu.vector_store %arg6[%10, %c0_2], %9 {strides = array<i32>} : memref<8x32xf32, #tpu.memory_space<vmem>>, vector<1x32xf32>,
    %c1_i32 = arith.constant 1 : i32
    %12 = arith.addi %2, %c1_i32 : i32
    %13 = arith.index_cast %12 : i32 to index
    %14 = memref.load %arg2[%13] : memref<16xi32, #tpu.memory_space<smem>>
    %c0_i32_3 = arith.constant 0 : i32
    %15 = arith.maxsi %14, %c0_i32_3 : i32
    %c63_i32_4 = arith.constant 63 : i32
    %16 = arith.minsi %15, %c63_i32_4 : i32
    %17 = arith.index_cast %16 : i32 to index
    %c0_5 = arith.constant 0 : index
    %18 = vector.load %arg3[%17, %c0_5] : memref<64x32xf32, #tpu.memory_space<vmem>>, vector<1x32xf32>
    %19 = arith.index_cast %c1_i32 : i32 to index
    %c0_6 = arith.constant 0 : index
    %20 = vector.load %arg6[%19, %c0_6] : memref<8x32xf32, #tpu.memory_space<vmem>>, vector<1x32xf32>
    tpu.vector_store %arg6[%19, %c0_6], %18 {strides = array<i32>} : memref<8x32xf32, #tpu.memory_space<vmem>>, vector<1x32xf32>,
    %c2_i32 = arith.constant 2 : i32
    %21 = arith.addi %2, %c2_i32 : i32
    %22 = arith.index_cast %21 : i32 to index
    %23 = memref.load %arg2[%22] : memref<16xi32, #tpu.memory_space<smem>>
    %c0_i32_7 = arith.constant 0 : i32
    %24 = arith.maxsi %23, %c0_i32_7 : i32
    %c63_i32_8 = arith.constant 63 : i32
    %25 = arith.minsi %24, %c63_i32_8 : i32
    %26 = arith.index_cast %25 : i32 to index
    %c0_9 = arith.constant 0 : index
    %27 = vector.load %arg3[%26, %c0_9] : memref<64x32xf32, #tpu.memory_space<vmem>>, vector<1x32xf32>
    %28 = arith.index_cast %c2_i32 : i32 to index
    %c0_10 = arith.constant 0 : index
    %29 = vector.load %arg6[%28, %c0_10] : memref<8x32xf32, #tpu.memory_space<vmem>>, vector<1x32xf32>
    tpu.vector_store %arg6[%28, %c0_10], %27 {strides = array<i32>} : memref<8x32xf32, #tpu.memory_space<vmem>>, vector<1x32xf32>,
    %c3_i32 = arith.constant 3 : i32
    %30 = arith.addi %2, %c3_i32 : i32
    %31 = arith.index_cast %30 : i32 to index
    %32 = memref.load %arg2[%31] : memref<16xi32, #tpu.memory_space<smem>>
    %c0_i32_11 = arith.constant 0 : i32
    %33 = arith.maxsi %32, %c0_i32_11 : i32
    %c63_i32_12 = arith.constant 63 : i32
    %34 = arith.minsi %33, %c63_i32_12 : i32
    %35 = arith.index_cast %34 : i32 to index
    %c0_13 = arith.constant 0 : index
    %36 = vector.load %arg3[%35, %c0_13] : memref<64x32xf32, #tpu.memory_space<vmem>>, vector<1x32xf32>
    %37 = arith.index_cast %c3_i32 : i32 to index
    %c0_14 = arith.constant 0 : index
    %38 = vector.load %arg6[%37, %c0_14] : memref<8x32xf32, #tpu.memory_space<vmem>>, vector<1x32xf32>
    tpu.vector_store %arg6[%37, %c0_14], %36 {strides = array<i32>} : memref<8x32xf32, #tpu.memory_space<vmem>>, vector<1x32xf32>,
    %c4_i32 = arith.constant 4 : i32
    %39 = arith.addi %2, %c4_i32 : i32
    %40 = arith.index_cast %39 : i32 to index
    %41 = memref.load %arg2[%40] : memref<16xi32, #tpu.memory_space<smem>>
    %c0_i32_15 = arith.constant 0 : i32
    %42 = arith.maxsi %41, %c0_i32_15 : i32
    %c63_i32_16 = arith.constant 63 : i32
    %43 = arith.minsi %42, %c63_i32_16 : i32
    %44 = arith.index_cast %43 : i32 to index
    %c0_17 = arith.constant 0 : index
    %45 = vector.load %arg3[%44, %c0_17] : memref<64x32xf32, #tpu.memory_space<vmem>>, vector<1x32xf32>
    %46 = arith.index_cast %c4_i32 : i32 to index
    %c0_18 = arith.constant 0 : index
    %47 = vector.load %arg6[%46, %c0_18] : memref<8x32xf32, #tpu.memory_space<vmem>>, vector<1x32xf32>
    tpu.vector_store %arg6[%46, %c0_18], %45 {strides = array<i32>} : memref<8x32xf32, #tpu.memory_space<vmem>>, vector<1x32xf32>,
    %c5_i32 = arith.constant 5 : i32
    %48 = arith.addi %2, %c5_i32 : i32
    %49 = arith.index_cast %48 : i32 to index
    %50 = memref.load %arg2[%49] : memref<16xi32, #tpu.memory_space<smem>>
    %c0_i32_19 = arith.constant 0 : i32
    %51 = arith.maxsi %50, %c0_i32_19 : i32
    %c63_i32_20 = arith.constant 63 : i32
    %52 = arith.minsi %51, %c63_i32_20 : i32
    %53 = arith.index_cast %52 : i32 to index
    %c0_21 = arith.constant 0 : index
    %54 = vector.load %arg3[%53, %c0_21] : memref<64x32xf32, #tpu.memory_space<vmem>>, vector<1x32xf32>
    %55 = arith.index_cast %c5_i32 : i32 to index
    %c0_22 = arith.constant 0 : index
    %56 = vector.load %arg6[%55, %c0_22] : memref<8x32xf32, #tpu.memory_space<vmem>>, vector<1x32xf32>
    tpu.vector_store %arg6[%55, %c0_22], %54 {strides = array<i32>} : memref<8x32xf32, #tpu.memory_space<vmem>>, vector<1x32xf32>,
    %c6_i32 = arith.constant 6 : i32
    %57 = arith.addi %2, %c6_i32 : i32
    %58 = arith.index_cast %57 : i32 to index
    %59 = memref.load %arg2[%58] : memref<16xi32, #tpu.memory_space<smem>>
    %c0_i32_23 = arith.constant 0 : i32
    %60 = arith.maxsi %59, %c0_i32_23 : i32
    %c63_i32_24 = arith.constant 63 : i32
    %61 = arith.minsi %60, %c63_i32_24 : i32
    %62 = arith.index_cast %61 : i32 to index
    %c0_25 = arith.constant 0 : index
    %63 = vector.load %arg3[%62, %c0_25] : memref<64x32xf32, #tpu.memory_space<vmem>>, vector<1x32xf32>
    %64 = arith.index_cast %c6_i32 : i32 to index
    %c0_26 = arith.constant 0 : index
    %65 = vector.load %arg6[%64, %c0_26] : memref<8x32xf32, #tpu.memory_space<vmem>>, vector<1x32xf32>
    tpu.vector_store %arg6[%64, %c0_26], %63 {strides = array<i32>} : memref<8x32xf32, #tpu.memory_space<vmem>>, vector<1x32xf32>,
    %c7_i32 = arith.constant 7 : i32
    %66 = arith.addi %2, %c7_i32 : i32
    %67 = arith.index_cast %66 : i32 to index
    %68 = memref.load %arg2[%67] : memref<16xi32, #tpu.memory_space<smem>>
    %c0_i32_27 = arith.constant 0 : i32
    %69 = arith.maxsi %68, %c0_i32_27 : i32
    %c63_i32_28 = arith.constant 63 : i32
    %70 = arith.minsi %69, %c63_i32_28 : i32
    %71 = arith.index_cast %70 : i32 to index
    %c0_29 = arith.constant 0 : index
    %72 = vector.load %arg3[%71, %c0_29] : memref<64x32xf32, #tpu.memory_space<vmem>>, vector<1x32xf32>
    %73 = arith.index_cast %c7_i32 : i32 to index
    %c0_30 = arith.constant 0 : index
    %74 = vector.load %arg6[%73, %c0_30] : memref<8x32xf32, #tpu.memory_space<vmem>>, vector<1x32xf32>
    tpu.vector_store %arg6[%73, %c0_30], %72 {strides = array<i32>} : memref<8x32xf32, #tpu.memory_space<vmem>>, vector<1x32xf32>,
    %c8_i32_31 = arith.constant 8 : i32
    %c0_32 = arith.constant 0 : index
    %c0_33 = arith.constant 0 : index
    %75 = vector.load %arg6[%c0_32, %c0_33] : memref<8x32xf32, #tpu.memory_space<vmem>>, vector<8x32xf32>
    %c0_34 = arith.constant 0 : index
    %c0_35 = arith.constant 0 : index
    %76 = vector.load %arg4[%c0_34, %c0_35] : memref<8x32xf32, #tpu.memory_space<vmem>>, vector<8x32xf32>
    %77 = arith.addf %75, %76 : vector<8x32xf32>
    %c0_36 = arith.constant 0 : index
    %c0_37 = arith.constant 0 : index
    %c0_38 = arith.constant 0 : index
    %78 = vector.load %arg5[%c0_36, %c0_37, %c0_38] : memref<1x8x32xf32, #tpu.memory_space<vmem>>, vector<1x8x32xf32>
    %79 = vector.shape_cast %78 : vector<1x8x32xf32> to vector<8x32xf32>
    %80 = vector.shape_cast %77 : vector<8x32xf32> to vector<1x8x32xf32>
    tpu.vector_store %arg5[%c0_36, %c0_37, %c0_38], %80 {strides = array<i32>} : memref<1x8x32xf32, #tpu.memory_space<vmem>>, vector<1x8x32xf32>,
    return
  }
  func.func @transform_0(%arg0: i32, %arg1: i32, %arg2: memref<16xi32, #tpu.memory_space<smem>>) -> (i32, i32) {
    %c0_i32 = arith.constant 0 : i32
    %c0_i32_0 = arith.constant 0 : i32
    %c0_i32_1 = arith.constant 0 : i32
    return %c0_i32, %c0_i32_0 : i32, i32
  }
  func.func @transform_1(%arg0: i32, %arg1: i32, %arg2: memref<16xi32, #tpu.memory_space<smem>>) -> (i32, i32) {
    %c0_i32 = arith.constant 0 : i32
    %c0_i32_0 = arith.constant 0 : i32
    return %arg0, %c0_i32 : i32, i32
  }
  func.func @transform_2(%arg0: i32, %arg1: i32, %arg2: memref<16xi32, #tpu.memory_space<smem>>) -> (i32, i32, i32) {
    %c0_i32 = arith.constant 0 : i32
    %c0_i32_0 = arith.constant 0 : i32
    return %arg1, %arg0, %c0_i32 : i32, i32, i32
  }
}

</mosaic_0001>

<llo_original>
// kernel: seg_embedding_forward.1
$region0: #{seg_embedding_forward.1}
  #allocation0 [shape = 'u32[]', space=smem, size = 0x4, offset = 0x4, fixed_abs, tag = 'smem constant byte address 0x4 - core index']
  #allocation1 [shape = 'u32[72,128]{1,0:T(1,128)}', space=vmem, size = 0x9000, scoped, tag = 'internal scratch']
  #allocation2 [shape = 'f32[8,32]{1,0:T(8,128)}', space=vmem, size = 0x1000, scoped, tag = 'scratch operand']
  #allocation3 [shape = 's32[1]{0}', space=sflag, size = 0x4, scoped, tag = 'scoped memory for seg_embedding_forward.1']
  #allocation4 [shape = 'u8[512]{0}', space=smem, size = 0x200, scoped, tag = 'prefetched SMEM operand 0']
  %s0 = inlined_call_operand.vmem [shape: s32[16], index: 0, kind: input, shape index: {}]
  %s1 = inlined_call_operand.vmem [shape: f32[64,32], index: 1, kind: input, shape index: {}]
  %s2 = inlined_call_operand.vmem [shape: f32[8,32], index: 2, kind: input, shape index: {}]
  %s3 = inlined_call_operand.hbm [shape: f32[2,8,32], index: 3, kind: output, shape index: {}]
  %s4 = sld [smem:[#allocation0]]
  $region41: #{seg_embedding_forward.1} parent=0
    _
  %s6 = ssub.s32 1, %s4
  %s7 = scalar_select 0, %s6, %s4
  %s9 = sshll.u32 %s0, 4
  %s10 = int_to_ptr.vmem [resolvable:$true] %s9
  %12 = dma.vmem_to_smem %s10, 16, [#allocation4], [#allocation3]
  %14 = dma.done [#allocation3], 16
  %15 = sfence
  $region1: #{seg_embedding_forward.1} parent=0
    #allocation5 [shape = 'u8[8192]{0}', space=vmem, size = 0x2000, scoped, tag = 'output window, operand 0']
    #allocation6 [shape = 's32[2]{0}', space=sflag, size = 0x8, scoped, tag = 'scoped memory for seg_embedding_forward.1']
    %16 = vsyncpa [#allocation6], 0
    %s17 = scalar_lea.sflag [#allocation6], 1
    %18 = vsyncpa %s17, 0
    loop: start=0, step=1, limit=4
    $region2: #{seg_embedding_forward.1} parent=1 // loop_pre_header
      _
    $region3: #{seg_embedding_forward.1} parent=1 // loop_header
      %s20 = sphi 0, %s24
      %p21 = scmp.ge.s32.totalorder %s20, 4
      %s27 = sphi 0, %s39
      %s28 = sphi 0, %s35
      %s29 = sphi 0, %s27
      %s30 = sphi 0, %s28
      %s31 = sphi 0, %s29
      %s32 = sphi 0, %s30
      %s40 = sphi 0, %s40
      %s42 = sphi 0, %s40
      %s43 = sphi 0, %s42
      %s57 = sphi 0, %s43
      %s63 = sphi 0, %s65
      %s66 = sphi 0, %s63
      %s67 = sphi 0, %s66
      %s83 = sphi 0, %s67
      %s91 = sphi 0, %s93
      %s94 = sphi 0, %s91
      %s95 = sphi 0, %s94
      %s111 = sphi 0, %s95
    $region4: #{seg_embedding_forward.1} parent=1 // loop_header_branch
      %23 = sbr.rel (%p21) target = $region8
    $region5: #{seg_embedding_forward.1} parent=1 // loop_body
      %s25 = ssub.s32 %s20, 1
      %s26 = ssub.s32 %s20, 2
      %s33 = sadd.s32 1, %s28
      %p34 = scmp.ge.s32.totalorder %s33, 2
      %s35 = scalar_select %p34, 0, %s33
      %s36 = sadd.s32 1, %s27
      %s37 = scalar_select %p34, %s36, %s27
      %p38 = scmp.ge.s32.totalorder %s37, 1
      %s39 = scalar_select %p38, 0, %s37
      %s41 = sadd.s32 %s40, 1
      %p44 = scmp.eq.s32.totalorder %s20, 1
      %p45 = scmp.ne.s32.totalorder %s40, %s42
      %p46 = scmp.eq.s32.totalorder %s20, 0
      %p47 = por %p45, %p46
      %p48 = scmp.ne.s32.totalorder %s40, %s42
      %p49 = scmp.eq.s32.totalorder %s25, 1
      %p50 = por %p48, %p49
      %p51 = scmp.ne.s32.totalorder %s42, %s43
      %p52 = scmp.eq.s32.totalorder %s25, 0
      %p53 = por %p51, %p52
      %p54 = scmp.ne.s32.totalorder %s42, %s43
      %p55 = scmp.eq.s32.totalorder %s26, 1
      %p56 = por %p54, %p55
      %p58 = scmp.ne.s32.totalorder %s43, %s57
      %p59 = scmp.eq.s32.totalorder %s26, 0
      %p60 = por %p58, %p59
      %s61 = ssub.s32 %s27, %s39
      %p62 = scmp.eq.s32.totalorder %s61, 0
      %s64 = sadd.s32 %s63, 1
      %s65 = scalar_select %p62, %s63, %s64
      %p68 = pneg %p62
      %p69 = scmp.eq.s32.totalorder %s20, 1
      %p70 = por %p68, %p69
      %p71 = scmp.ne.s32.totalorder %s63, %s66
      %p72 = scmp.eq.s32.totalorder %s20, 0
      %p73 = por %p71, %p72
      %p74 = scmp.ne.s32.totalorder %s63, %s66
      %p75 = scmp.eq.s32.totalorder %s25, 1
      %p76 = por %p74, %p75
      %p77 = scmp.ne.s32.totalorder %s66, %s67
      %p78 = scmp.eq.s32.totalorder %s25, 0
      %p79 = por %p77, %p78
      %p80 = scmp.ne.s32.totalorder %s66, %s67
      %p81 = scmp.eq.s32.totalorder %s26, 1
      %p82 = por %p80, %p81
      %p84 = scmp.ne.s32.totalorder %s67, %s83
      %p85 = scmp.eq.s32.totalorder %s26, 0
      %p86 = por %p84, %p85
      %s87 = ssub.s32 %s28, %s35
      %s88 = ssub.s32 %s27, %s39
      %s89 = sor.u32 %s87, %s88
      %p90 = scmp.eq.s32.totalorder %s89, 0
      %s92 = sadd.s32 %s91, 1
      %s93 = scalar_select %p90, %s91, %s92
      %p96 = pneg %p90
      %p97 = scmp.eq.s32.totalorder %s20, 1
      %p98 = por %p96, %p97
      %p99 = scmp.ne.s32.totalorder %s91, %s94
      %p100 = scmp.eq.s32.totalorder %s20, 0
      %p101 = por %p99, %p100
      %p102 = scmp.ne.s32.totalorder %s91, %s94
      %p103 = scmp.eq.s32.totalorder %s25, 1
      %p104 = por %p102, %p103
      %p105 = scmp.ne.s32.totalorder %s94, %s95
      %p106 = scmp.eq.s32.totalorder %s25, 0
      %p107 = por %p105, %p106
      %p108 = scmp.ne.s32.totalorder %s94, %s95
      %p109 = scmp.eq.s32.totalorder %s26, 1
      %p110 = por %p108, %p109
      %p112 = scmp.ne.s32.totalorder %s95, %s111
      %p113 = scmp.eq.s32.totalorder %s26, 0
      %p114 = por %p112, %p113
      %p115 = scmp.le.s32.totalorder 1, %s20
      %p116 = scmp.lt.s32.totalorder %s20, 3
      %p117 = pnand %p115, %p116
      %p118 = pneg %p117
      // Predicated region
      $region9: #{seg_embedding_forward.1} parent=5 // pred_check
        _
      $region10: #{seg_embedding_forward.1} parent=5 // pred_check_branch
        %120 = sbr.rel (%p117) target = $region12
      $region11: #{seg_embedding_forward.1} parent=5 // pred_region
        %s121 = ssub.s32 %s20, 1
        // Predicated region
        $region13: #{seg_embedding_forward.1} parent=11 // pred_check
          %p122 = pneg %p53
        $region14: #{seg_embedding_forward.1} parent=11 // pred_check_branch
          %124 = sbr.rel (%p122) target = $region16
        $region15: #{seg_embedding_forward.1} parent=11 // pred_region
          _
        $region16: #{seg_embedding_forward.1} parent=11 // pred_fallthru
          _
        // Predicated region
        $region17: #{seg_embedding_forward.1} parent=11 // pred_check
          %p125 = pneg %p79
        $region18: #{seg_embedding_forward.1} parent=11 // pred_check_branch
          %127 = sbr.rel (%p125) target = $region20
        $region19: #{seg_embedding_forward.1} parent=11 // pred_region
          %p128 = scmp.lt.s32.totalorder %s29, 0
          %s129 = scalar_select %p128, %s29, 0
          %s130 = smul.addr %s129, 8
          %s131 = scalar_lea.vmem %s2, %s130
        $region20: #{seg_embedding_forward.1} parent=11 // pred_fallthru
          _
      $region12: #{seg_embedding_forward.1} parent=5 // pred_fallthru
        _
      %p132 = scmp.lt.s32.totalorder %s20, 2
      // Predicated region
      $region21: #{seg_embedding_forward.1} parent=5 // pred_check
        %p133 = pneg %p132
      $region22: #{seg_embedding_forward.1} parent=5 // pred_check_branch
        %135 = sbr.rel (%p133) target = $region24
      $region23: #{seg_embedding_forward.1} parent=5 // pred_region
        _
      $region24: #{seg_embedding_forward.1} parent=5 // pred_fallthru
        _
      %p136 = scmp.le.s32.totalorder 1, %s20
      %p137 = scmp.lt.s32.totalorder %s20, 3
      %p138 = pnand %p136, %p137
      %p139 = pneg %p138
      // Predicated region
      $region25: #{seg_embedding_forward.1} parent=5 // pred_check
        _
      $region26: #{seg_embedding_forward.1} parent=5 // pred_check_branch
        %141 = sbr.rel (%p138) target = $region28
      $region27: #{seg_embedding_forward.1} parent=5 // pred_region
        %s142 = ssub.s32 %s20, 1
        %p143 = pneg %p53
        %p144 = pneg %p50
        %p145 = scmp.lt.s32.totalorder %s29, 0
        %s146 = scalar_select %p145, %s29, 0
        %s147 = smul.addr %s146, 8
        %s148 = scalar_lea.vmem %s2, %s147
        %p149 = pneg %p79
        %p150 = pneg %p76
        %p151 = pneg %p107
        %p152 = pneg %p104
        %s153 = sand.u32 %s94, 1
        %s154 = scalar_lea.sflag [#allocation6], %s153
        %s155 = sand.u32 %s94, 1
        %s156 = smul.addr %s155, 8
        %s157 = scalar_lea.vmem [#allocation5], %s156
        %p158 = scmp.lt.s32.totalorder %s29, 0
        %s159 = scalar_select %p158, %s29, 0
        %s160 = smul.addr %s159, 8
        %s161 = scalar_lea.vmem %s2, %s160
        %s162 = smul.u32 %s30, 8
        %s163 = smul.u32 %s29, 8
        %s164 = sadd.s32 %s162, %s163
        %s165 = sld [smem:[#allocation4 + %s164]]
        %p166 = scmp.gt.s32.totalorder %s165, 0
        %s167 = scalar_select %p166, %s165, 0
        %p168 = scmp.lt.s32.totalorder %s167, 63
        %s169 = scalar_select %p168, %s167, 63
        %s170 = scalar_lea.vmem %s1, %s169
        %v171 = vld [vmem:[%s170] sm:$0x1]
        %vm172 = vcmask 253952
        %173 = vst.msk [vmem:[#allocation2] sm:$0x1] %vm172, %v171
        %s174 = sadd.s32 %s164, 1
        %s175 = sld [smem:[#allocation4 + %s174]]
        %p176 = scmp.gt.s32.totalorder %s175, 0
        %s177 = scalar_select %p176, %s175, 0
        %p178 = scmp.lt.s32.totalorder %s177, 63
        %s179 = scalar_select %p178, %s177, 63
        %s180 = scalar_lea.vmem %s1, %s179
        %v181 = vld [vmem:[%s180] sm:$0x1]
        %182 = vst.msk [vmem:[#allocation2 + $0x1] sm:$0x1] %vm172, %v181
        %s183 = sadd.s32 %s164, 2
        %s184 = sld [smem:[#allocation4 + %s183]]
        %p185 = scmp.gt.s32.totalorder %s184, 0
        %s186 = scalar_select %p185, %s184, 0
        %p187 = scmp.lt.s32.totalorder %s186, 63
        %s188 = scalar_select %p187, %s186, 63
        %s189 = scalar_lea.vmem %s1, %s188
        %v190 = vld [vmem:[%s189] sm:$0x1]
        %191 = vst.msk [vmem:[#allocation2 + $0x2] sm:$0x1] %vm172, %v190
        %s192 = sadd.s32 %s164, 3
        %s193 = sld [smem:[#allocation4 + %s192]]
        %p194 = scmp.gt.s32.totalorder %s193, 0
        %s195 = scalar_select %p194, %s193, 0
        %p196 = scmp.lt.s32.totalorder %s195, 63
        %s197 = scalar_select %p196, %s195, 63
        %s198 = scalar_lea.vmem %s1, %s197
        %v199 = vld [vmem:[%s198] sm:$0x1]
        %200 = vst.msk [vmem:[#allocation2 + $0x3] sm:$0x1] %vm172, %v199
        %s201 = sadd.s32 %s164, 4
        %s202 = sld [smem:[#allocation4 + %s201]]
        %p203 = scmp.gt.s32.totalorder %s202, 0
        %s204 = scalar_select %p203, %s202, 0
        %p205 = scmp.lt.s32.totalorder %s204, 63
        %s206 = scalar_select %p205, %s204, 63
        %s207 = scalar_lea.vmem %s1, %s206
        %v208 = vld [vmem:[%s207] sm:$0x1]
        %209 = vst.msk [vmem:[#allocation2 + $0x4] sm:$0x1] %vm172, %v208
        %s210 = sadd.s32 %s164, 5
        %s211 = sld [smem:[#allocation4 + %s210]]
        %p212 = scmp.gt.s32.totalorder %s211, 0
        %s213 = scalar_select %p212, %s211, 0
        %p214 = scmp.lt.s32.totalorder %s213, 63
        %s215 = scalar_select %p214, %s213, 63
        %s216 = scalar_lea.vmem %s1, %s215
        %v217 = vld [vmem:[%s216] sm:$0x1]
        %218 = vst.msk [vmem:[#allocation2 + $0x5] sm:$0x1] %vm172, %v217
        %s219 = sadd.s32 %s164, 6
        %s220 = sld [smem:[#allocation4 + %s219]]
        %p221 = scmp.gt.s32.totalorder %s220, 0
        %s222 = scalar_select %p221, %s220, 0
        %p223 = scmp.lt.s32.totalorder %s222, 63
        %s224 = scalar_select %p223, %s222, 63
        %s225 = scalar_lea.vmem %s1, %s224
        %v226 = vld [vmem:[%s225] sm:$0x1]
        %227 = vst.msk [vmem:[#allocation2 + $0x6] sm:$0x1] %vm172, %v226
        %s228 = sadd.s32 %s164, 7
        %s229 = sld [smem:[#allocation4 + %s228]]
        %p230 = scmp.gt.s32.totalorder %s229, 0
        %s231 = scalar_select %p230, %s229, 0
        %p232 = scmp.lt.s32.totalorder %s231, 63
        %s233 = scalar_select %p232, %s231, 63
        %s234 = scalar_lea.vmem %s1, %s233
        %v235 = vld [vmem:[%s234] sm:$0x1]
        %236 = vst.msk [vmem:[#allocation2 + $0x7] sm:$0x1] %vm172, %v235
        %v237 = vld [vmem:[#allocation2] sm:$0xff]
        %v238 = vld [vmem:[%s161] sm:$0xff]
        %v239 = vadd.f32 %v237, %v238
        %vm240 = vcmask 261120
        %241 = vst.msk [vmem:[%s157] sm:$0xff] %vm240, %v239
        %s242 = sand.u32 %s94, 1
        %s243 = scalar_lea.sflag [#allocation6], %s242
        %s244 = sand.u32 %s94, 1
        %s245 = smul.addr %s244, 8
        %s246 = scalar_lea.vmem [#allocation5], %s245
        // Predicated region
        $region29: #{seg_embedding_forward.1} parent=27 // pred_check
          %p247 = pneg %p104
        $region30: #{seg_embedding_forward.1} parent=27 // pred_check_branch
          %249 = sbr.rel (%p247) target = $region32
        $region31: #{seg_embedding_forward.1} parent=27 // pred_region
          %251 = vsyncadd %s243, 0
          %s252 = sadd.s32 %s29, %s30
          %s253 = smul.addr %s252, 8
          %s254 = scalar_lea.hbm %s3, %s253
          %s256 = sshll.u32 %s246, 4
          %s257 = int_to_ptr.vmem [resolvable:$true] %s256
          %s258 = sshll.u32 %s254, 4
          %s259 = int_to_ptr.hbm [resolvable:$true] %s258
          %261 = dma.vmem_to_hbm [thread:$0]  %s257, 128, %s259, %s243
        $region32: #{seg_embedding_forward.1} parent=27 // pred_fallthru
          _
      $region28: #{seg_embedding_forward.1} parent=5 // pred_fallthru
        _
      %p262 = scmp.le.s32.totalorder 2, %s20
      // Predicated region
      $region33: #{seg_embedding_forward.1} parent=5 // pred_check
        %p263 = pneg %p262
      $region34: #{seg_embedding_forward.1} parent=5 // pred_check_branch
        %265 = sbr.rel (%p263) target = $region36
      $region35: #{seg_embedding_forward.1} parent=5 // pred_region
        %s266 = ssub.s32 %s20, 2
        // Predicated region
        $region37: #{seg_embedding_forward.1} parent=35 // pred_check
          %p267 = pneg %p110
        $region38: #{seg_embedding_forward.1} parent=35 // pred_check_branch
          %269 = sbr.rel (%p267) target = $region40
        $region39: #{seg_embedding_forward.1} parent=35 // pred_region
          %s270 = sand.u32 %s95, 1
          %s271 = scalar_lea.sflag [#allocation6], %s270
          %s272 = sand.u32 %s95, 1
          %s273 = smul.addr %s272, 8
          %s274 = scalar_lea.vmem [#allocation5], %s273
          %276 = dma.done %s271, 128
        $region40: #{seg_embedding_forward.1} parent=35 // pred_fallthru
          _
      $region36: #{seg_embedding_forward.1} parent=5 // pred_fallthru
        _
    $region6: #{seg_embedding_forward.1} parent=1 // loop_footer
      %s24 = sadd.s32 1, %s20
    $region7: #{seg_embedding_forward.1} parent=1 // loop_footer_branch
      %19 = sbr.rel target = $region3
    $region8: #{seg_embedding_forward.1} parent=1 // loop_exit
      _
    %277 = vsyncpa [#allocation6], 1
    %s278 = scalar_lea.sflag [#allocation6], 1
    %279 = vsyncpa %s278, 1

</llo_original>
